<compile_context>
chip_gen: v7x
topology: tpu7x:2x2x1
jax: 0.10.0
libtpu: 0.0.40
codegen_flags: <defaults>
</compile_context>

<pallas_src>
import jax
import jax.numpy as jnp
from jax.experimental import pallas as pl
from jax.experimental.pallas import tpu as pltpu

_LANE = 128
_SUBLANE = 8
_MIN_SPLIT_ROWS = 512                 # min rows per core when sharding a tile
_V5E_DEFAULT_SCOPED_VMEM = 16 << 20   # smallest default scoped-VMEM limit


def bigram_kernel(idx_ref, table_ref, out_ref):
    # idx_ref:   (TM, 1)   int32 token ids for this block
    # table_ref: (Vp, Cp)  float32 embedding table (grid-invariant, VMEM)
    # out_ref:   (TM, Cp)  float32 gathered logits
    tm = out_ref.shape[0]
    vp = table_ref.shape[0]
    ids = idx_ref[...]                                       # (TM, 1)
    cols = jax.lax.broadcasted_iota(jnp.int32, (tm, vp), 1)  # (TM, Vp)
    one_hot = (cols == ids).astype(table_ref.dtype)          # (TM, Vp)
    # MXU one-hot gather; exact (1.0*x + 0.0*y) with f32 accumulation.
    # NOTE: out-of-range ids match no column -> all-zero logits row (PyTorch's
    # nn.Embedding would raise instead).
    out_ref[...] = jnp.dot(
        one_hot, table_ref[...], preferred_element_type=jnp.float32
    )


def _round_up(x: int, m: int) -> int:
    return (x + m - 1) // m * m


def _tensorcores_per_chip() -> int:
    """2 on v7x (grid 'parallel' axes shard across its 2 TCs), else 1."""
    try:
        kind = jax.devices()[0].device_kind.lower()
    except Exception:  # no devices visible at trace time -> be conservative
        return 1
    return 2 if "v7" in kind else 1


def _default_tm(vp: int, cp: int) -> int:
    # Bigger tiles amortize the ~0.35us per-grid-step overhead; shrink as the
    # vocab width (and hence per-tile VMEM) grows.
    width = max(vp, cp)
    if width <= 512:
        return 2048
    if width <= 1024:
        return 1024
    return 512


def bigram_forward(idx, table, *, tm=None):
    """idx: (B, T) integer token ids, table: (V, C) -> logits (B, T, C) f32."""
    B, T = idx.shape
    V, C = table.shape
    N = B * T

    # --- lane-align the vocab dims (lane-dense stores / full MXU tiles) ------
    Vp = _round_up(V, _LANE)   # gather-row / contraction dim
    Cp = _round_up(C, _LANE)   # output lane dim
    table = table.astype(jnp.float32)
    if (Vp, Cp) != (V, C):
        # Padded rows are never selected by in-range ids; padded cols are
        # sliced off at the very end.
        table = jnp.zeros((Vp, Cp), jnp.float32).at[:V, :C].set(table)

    # --- token tile -----------------------------------------------------------
    if tm is None:
        tm = _default_tm(Vp, Cp)
    tm = _round_up(max(int(tm), _SUBLANE), _SUBLANE)
    tm_eff = min(tm, _round_up(N, _SUBLANE))
    # Split a single block in two only on a 2-TensorCore part (v7x) and only
    # if each half still keeps the MXU / output DMA fed; on v5e/v6e this would
    # just add a serial grid step with no parallelism gain.
    if (tm_eff >= N and _tensorcores_per_chip() >= 2
            and N >= 2 * _MIN_SPLIT_ROWS):
        tm_eff = max(_MIN_SPLIT_ROWS, _round_up(pl.cdiv(N, 2), _SUBLANE))

    num_blocks = pl.cdiv(N, tm_eff)   # ragged last block is clipped by Pallas

    # --- grid-invariant table: drop its 2nd pipeline buffer when it is big ---
    table_bytes = Vp * Cp * 4
    table_bufs = 2
    table_spec_kwargs = {}
    if table_bytes >= (1 << 20):
        # Negligible at V=128 (64 KiB duplicate) so the small-vocab path keeps
        # the plain double-buffered spec; at V ~ 2K this saves ~16 MiB, which
        # matters most on v7x's 64 MiB VMEM.
        table_spec_kwargs["pipeline_mode"] = pl.Buffered(1)
        table_bufs = 1

    # --- VMEM budget / compiler params ----------------------------------------
    vmem_need = (
        2 * tm_eff * Cp * 4          # double-buffered output blocks
        + 2 * tm_eff * _LANE * 4     # (tm, 1) i32 idx blocks, lane-padded
        + table_bufs * table_bytes   # resident table buffer(s)
        + tm_eff * (Vp + Cp) * 4     # in-kernel one-hot + f32 matmul result
    )
    compiler_kwargs = dict(dimension_semantics=("parallel",))
    if vmem_need > _V5E_DEFAULT_SCOPED_VMEM:
        # Raise the scoped limit explicitly (v5e defaults to 16 MiB), with
        # headroom, but stay well under v7x's 64 MiB physical VMEM.
        compiler_kwargs["vmem_limit_bytes"] = int(min(vmem_need * 1.5, 48 << 20))

    idx_flat = idx.reshape(N, 1).astype(jnp.int32)

    logits_flat = pl.pallas_call(
        bigram_kernel,
        out_shape=jax.ShapeDtypeStruct((N, Cp), jnp.float32),
        grid_spec=pltpu.PrefetchScalarGridSpec(
            num_scalar_prefetch=0,
            grid=(num_blocks,),
            in_specs=[
                pl.BlockSpec((tm_eff, 1), lambda i: (i, 0)),        # token ids
                pl.BlockSpec((Vp, Cp), lambda i: (0, 0),
                             **table_spec_kwargs),                  # full table
            ],
            out_specs=pl.BlockSpec((tm_eff, Cp), lambda i: (i, 0)),
        ),
        compiler_params=pltpu.CompilerParams(**compiler_kwargs),
    )(idx_flat, table)

    if Cp != C:
        logits_flat = logits_flat[:, :C]
    return logits_flat.reshape(B, T, C)


if __name__ == "__main__":
    key = jax.random.PRNGKey(0)
    k_tab, k_idx1, k_idx2, k_tab2, k_idx3 = jax.random.split(key, 5)

    # --- lane-aligned vocab (V = 128), small canonical shape -------------------
    vocab_size = 128
    # nn.Embedding default init: N(0, 1)
    table = jax.random.normal(k_tab, (vocab_size, vocab_size), dtype=jnp.float32)

    B, T = 2, 8
    idx = jax.random.randint(k_idx1, (B, T), 0, vocab_size, dtype=jnp.int32)
    logits = jax.block_until_ready(bigram_forward(idx, table))
    ref = jnp.take(table, idx, axis=0)
    assert logits.shape == (B, T, vocab_size)
    assert jnp.allclose(logits, ref, atol=1e-5, rtol=1e-5)

    # --- awkward token count: exercises the ragged-last-block (clip) path ------
    B2, T2 = 3, 345                       # N = 1035, not a multiple of the tile
    idx2 = jax.random.randint(k_idx2, (B2, T2), 0, vocab_size, dtype=jnp.int32)
    logits2 = jax.block_until_ready(bigram_forward(idx2, table))
    ref2 = jnp.take(table, idx2, axis=0)
    assert logits2.shape == (B2, T2, vocab_size)
    assert jnp.allclose(logits2, ref2, atol=1e-5, rtol=1e-5)

    # --- non-128-multiple vocab (char-level style V = 65): lane-pad path -------
    vocab65 = 65
    table65 = jax.random.normal(k_tab2, (vocab65, vocab65), dtype=jnp.float32)
    B3, T3 = 2, 7
    idx3 = jax.random.randint(k_idx3, (B3, T3), 0, vocab65, dtype=jnp.int32)
    logits3 = jax.block_until_ready(bigram_forward(idx3, table65))
    ref3 = jnp.take(table65, idx3, axis=0)
    assert logits3.shape == (B3, T3, vocab65)
    assert jnp.allclose(logits3, ref3, atol=1e-5, rtol=1e-5)

    print("KERNEL_OK")
</pallas_src>

<mosaic_0001>
module attributes {stable_mosaic.version = 11 : i64} {
  func.func @bigram_kernel(%arg0: i32, %arg1: memref<16x1xi32, #tpu.memory_space<vmem>>, %arg2: memref<128x128xf32, #tpu.memory_space<vmem>>, %arg3: memref<16x128xf32, #tpu.memory_space<vmem>>) attributes {dimension_semantics = [#tpu.dimension_semantics<parallel>], iteration_bounds = array<i64: 1>, scalar_prefetch = 0 : i64, scratch_operands = 0 : i64, tpu.core_type = #tpu.core_type<tc>, window_params = [{transform_indices = @transform_0, window_bounds = array<i64: 16, 1>}, {pipeline_mode = #tpu.pipeline_mode<synchronous>, transform_indices = @transform_1, window_bounds = array<i64: 128, 128>}, {transform_indices = @transform_2, window_bounds = array<i64: 16, 128>}]} {
    %c0 = arith.constant 0 : index
    %c0_0 = arith.constant 0 : index
    %0 = vector.load %arg1[%c0, %c0_0] : memref<16x1xi32, #tpu.memory_space<vmem>>, vector<16x1xi32>
    %1 = tpu.iota {dimensions = array<i32: 1>} : vector<16x128xi32>
    %2 = vector.broadcast %0 : vector<16x1xi32> to vector<16x128xi32>
    %3 = arith.cmpi eq, %1, %2 : vector<16x128xi32>
    %4 = arith.extui %3 : vector<16x128xi1> to vector<16x128xi32>
    %5 = arith.sitofp %4 : vector<16x128xi32> to vector<16x128xf32>
    %c0_1 = arith.constant 0 : index
    %c0_2 = arith.constant 0 : index
    %6 = vector.load %arg2[%c0_1, %c0_2] : memref<128x128xf32, #tpu.memory_space<vmem>>, vector<128x128xf32>
    %cst = arith.constant dense<0.000000e+00> : vector<16x128xf32>
    %7 = tpu.matmul %5, %6, %cst {dimension_numbers = #tpu.dot_dimension_numbers<[1], [0], [0], [1], [0, 0, 1, 1], [], []>} : vector<16x128xf32>, vector<128x128xf32>, vector<16x128xf32> -> vector<16x128xf32>
    %c0_3 = arith.constant 0 : index
    %c0_4 = arith.constant 0 : index
    %8 = vector.load %arg3[%c0_3, %c0_4] : memref<16x128xf32, #tpu.memory_space<vmem>>, vector<16x128xf32>
    tpu.vector_store %arg3[%c0_3, %c0_4], %7 {strides = array<i32>} : memref<16x128xf32, #tpu.memory_space<vmem>>, vector<16x128xf32>,
    return
  }
  func.func @transform_0(%arg0: i32) -> (i32, i32) {
    %c0_i32 = arith.constant 0 : i32
    %c0_i32_0 = arith.constant 0 : i32
    return %arg0, %c0_i32 : i32, i32
  }
  func.func @transform_1(%arg0: i32) -> (i32, i32) {
    %c0_i32 = arith.constant 0 : i32
    %c0_i32_0 = arith.constant 0 : i32
    %c0_i32_1 = arith.constant 0 : i32
    return %c0_i32, %c0_i32_0 : i32, i32
  }
  func.func @transform_2(%arg0: i32) -> (i32, i32) {
    %c0_i32 = arith.constant 0 : i32
    %c0_i32_0 = arith.constant 0 : i32
    return %arg0, %c0_i32 : i32, i32
  }
}

</mosaic_0001>

<llo_original>
// kernel: tpu_custom_call.1
$region0: #{tpu_custom_call.1}
  #allocation0 [shape = 'u32[]', space=smem, size = 0x4, offset = 0x4, fixed_abs, tag = 'smem constant byte address 0x4 - core index']
  #allocation1 [shape = 'u32[144,128]{1,0:T(1,128)}', space=vmem, size = 0x12000, scoped, tag = 'internal scratch']
  %s0 = inlined_call_operand.vmem [shape: s32[16,1], index: 0, kind: input, shape index: {}]
  %s1 = inlined_call_operand.hbm [shape: f32[128,128], index: 1, kind: input, shape index: {}]
  %s2 = inlined_call_operand.hbm [shape: f32[16,128], index: 2, kind: output, shape index: {}]
  %s3 = sld [smem:[#allocation0]]
  $region22: #{tpu_custom_call.1} parent=0
    _
  %s5 = ssub.s32 1, %s3
  %s6 = scalar_select 0, %s5, %s3
  $region1: #{tpu_custom_call.1} parent=0
    #allocation2 [shape = 'u8[65536]{0}', space=vmem, size = 0x10000, scoped, tag = 'input window, operand 1, single buffered']
    #allocation3 [shape = 's32[1]{0}', space=sflag, size = 0x4, scoped, tag = 'scoped memory for tpu_custom_call.1']
    #allocation4 [shape = 's32[1]{0}', space=sflag, size = 0x4, scoped, tag = 'scoped memory for tpu_custom_call.1']
    #allocation5 [shape = 'u8[8192]{0}', space=vmem, size = 0x2000, scoped, tag = 'output window, operand 0, single buffered']
    %7 = vsyncpa [#allocation3], 0
    %8 = vsyncpa [#allocation4], 0
    // Predicated region
    $region2: #{tpu_custom_call.1} parent=1 // pred_check
      _
    $region3: #{tpu_custom_call.1} parent=1 // pred_check_branch
      %10 = sbr.rel (0) target = $region5
    $region4: #{tpu_custom_call.1} parent=1 // pred_region
      _
    $region5: #{tpu_custom_call.1} parent=1 // pred_fallthru
      _
    // Predicated region
    $region6: #{tpu_custom_call.1} parent=1 // pred_check
      _
    $region7: #{tpu_custom_call.1} parent=1 // pred_check_branch
      %12 = sbr.rel (0) target = $region9
    $region8: #{tpu_custom_call.1} parent=1 // pred_region
      %s14 = ssub.s32 2048, 2048
      %15 = vsyncadd [#allocation3], %s14
      %s16 = sshll.u32 [#allocation2], 4
      %s17 = int_to_ptr.vmem [resolvable:$true] %s16
      %22 = dma.hbm_to_vmem [thread:$0]  %s1, 2048, %s17, [#allocation3], 128, 128, 8
    $region9: #{tpu_custom_call.1} parent=1 // pred_fallthru
      _
    // Predicated region
    $region10: #{tpu_custom_call.1} parent=1 // pred_check
      _
    $region11: #{tpu_custom_call.1} parent=1 // pred_check_branch
      %24 = sbr.rel (0) target = $region13
    $region12: #{tpu_custom_call.1} parent=1 // pred_region
      %25 = dma.done [#allocation3], 2048
    $region13: #{tpu_custom_call.1} parent=1 // pred_fallthru
      _
    %v26 = vld [vmem:[%s0] sm:$0xff]
    %v27 = vld [vmem:[%s0 + $0x8] sm:$0xff]
    %v28 = vlaneseq
    %v29 = vand.u32 %v28, 127
    %30 = vset.pattern.permute.xlu0 0
    %31 = vperm.xlu0 %30, %v26
    %v32 = vpop.permute.xlu0 %31
    %33 = vset.pattern.permute.xlu0 0
    %34 = vperm.xlu0 %33, %v27
    %v35 = vpop.permute.xlu0 %34
    %vm36 = vcmp.eq.s32.totalorder %v29, %v32
    %vm37 = vcmp.eq.s32.totalorder %v29, %v35
    %v38 = vsel %vm36, 1, 0
    %v39 = vsel %vm37, 1, 0
    %v40 = vcvt.s32.f32 %v38
    %v41 = vcvt.s32.f32 %v39
    %v42 = vld [vmem:[#allocation2] sm:$0xff]
    %v43 = vld [vmem:[#allocation2 + $0x8] sm:$0xff]
    %v44 = vld [vmem:[#allocation2 + $0x10] sm:$0xff]
    %v45 = vld [vmem:[#allocation2 + $0x18] sm:$0xff]
    %v46 = vld [vmem:[#allocation2 + $0x20] sm:$0xff]
    %v47 = vld [vmem:[#allocation2 + $0x28] sm:$0xff]
    %v48 = vld [vmem:[#allocation2 + $0x30] sm:$0xff]
    %v49 = vld [vmem:[#allocation2 + $0x38] sm:$0xff]
    %v50 = vld [vmem:[#allocation2 + $0x40] sm:$0xff]
    %v51 = vld [vmem:[#allocation2 + $0x48] sm:$0xff]
    %v52 = vld [vmem:[#allocation2 + $0x50] sm:$0xff]
    %v53 = vld [vmem:[#allocation2 + $0x58] sm:$0xff]
    %v54 = vld [vmem:[#allocation2 + $0x60] sm:$0xff]
    %v55 = vld [vmem:[#allocation2 + $0x68] sm:$0xff]
    %v56 = vld [vmem:[#allocation2 + $0x70] sm:$0xff]
    %v57 = vld [vmem:[#allocation2 + $0x78] sm:$0xff]
    %58 = vmatprep.subr.mxu0 0.0
    %59 = vmatpush1.msra.mxu0 %v42
    %60 = vmatprep.subr.mxu0 0.0
    %61 = vmatpush1.msra.mxu0 %v43
    %62 = vmatprep.subr.mxu0 0.0
    %63 = vmatpush1.msra.mxu0 %v44
    %64 = vmatprep.subr.mxu0 0.0
    %65 = vmatpush1.msra.mxu0 %v45
    %66 = vmatprep.subr.mxu0 0.0
    %67 = vmatpush1.msra.mxu0 %v46
    %68 = vmatprep.subr.mxu0 0.0
    %69 = vmatpush1.msra.mxu0 %v47
    %70 = vmatprep.subr.mxu0 0.0
    %71 = vmatpush1.msra.mxu0 %v48
    %72 = vmatprep.subr.mxu0 0.0
    %73 = vmatpush1.msra.mxu0 %v49
    %74 = vmatprep.subr.mxu0 0.0
    %75 = vmatpush1.msra.mxu0 %v50
    %76 = vmatprep.subr.mxu0 0.0
    %77 = vmatpush1.msra.mxu0 %v51
    %78 = vmatprep.subr.mxu0 0.0
    %79 = vmatpush1.msra.mxu0 %v52
    %80 = vmatprep.subr.mxu0 0.0
    %81 = vmatpush1.msra.mxu0 %v53
    %82 = vmatprep.subr.mxu0 0.0
    %83 = vmatpush1.msra.mxu0 %v54
    %84 = vmatprep.subr.mxu0 0.0
    %85 = vmatpush1.msra.mxu0 %v55
    %86 = vmatprep.subr.mxu0 0.0
    %87 = vmatpush1.msra.mxu0 %v56
    %88 = vmatprep.subr.mxu0 0.0
    %89 = vmatpush1.msra.mxu0 %v57
    %90 = vmatprep.subr.mxu0 0.0
    %91 = vmatpush1.msra.mxu0 0.0
    %92 = vmatprep.subr.mxu0 0.0
    %93 = vmatpush1.msra.mxu0 0.0
    %94 = vmatprep.subr.mxu0 0.0
    %95 = vmatpush1.msra.mxu0 0.0
    %96 = vmatprep.subr.mxu0 0.0
    %97 = vmatpush1.msra.mxu0 0.0
    %98 = vmatprep.subr.mxu0 0.0
    %99 = vmatpush1.msra.mxu0 0.0
    %100 = vmatprep.subr.mxu0 0.0
    %101 = vmatpush1.msra.mxu0 0.0
    %102 = vmatprep.subr.mxu0 0.0
    %103 = vmatpush1.msra.mxu0 0.0
    %104 = vmatprep.subr.mxu0 0.0
    %105 = vmatpush1.msra.mxu0 0.0
    %106 = vmatprep.subr.mxu0 0.0
    %107 = vmatpush1.msra.mxu0 0.0
    %108 = vmatprep.subr.mxu0 0.0
    %109 = vmatpush1.msra.mxu0 0.0
    %110 = vmatprep.subr.mxu0 0.0
    %111 = vmatpush1.msra.mxu0 0.0
    %112 = vmatprep.subr.mxu0 0.0
    %113 = vmatpush1.msra.mxu0 0.0
    %114 = vmatprep.subr.mxu0 0.0
    %115 = vmatpush1.msra.mxu0 0.0
    %116 = vmatprep.subr.mxu0 0.0
    %117 = vmatpush1.msra.mxu0 0.0
    %118 = vmatprep.subr.mxu0 0.0
    %119 = vmatpush1.msra.mxu0 0.0
    %120 = vmatprep.subr.mxu0 0.0
    %121 = vmatpush1.msra.mxu0 0.0
    %122 = vmatprep.mubr.f32.mxu0 0.0
    %123 = vmatmul.mubr.f32.gmra.mrb[0].mxu0 %v40
    %v124 = vpop.f32.mrb[0].mxu0
    %v125 = vadd.f32 0.0, %v124
    %v126 = vpop.f32.mrb[0].mxu0
    %127 = vmatprep.mubr.f32.mxu0 0.0
    %128 = vmatmul.mubr.f32.gmra.mrb[0].mxu0 %v41
    %v129 = vpop.f32.mrb[0].mxu0
    %v130 = vadd.f32 0.0, %v129
    %v131 = vpop.f32.mrb[0].mxu0
    %132 = vdwg.mxu0
    %133 = vst [vmem:[#allocation5] sm:$0xff] %v125
    %134 = vst [vmem:[#allocation5 + $0x8] sm:$0xff] %v130
    // Predicated region
    $region14: #{tpu_custom_call.1} parent=1 // pred_check
      _
    $region15: #{tpu_custom_call.1} parent=1 // pred_check_branch
      %136 = sbr.rel (0) target = $region17
    $region16: #{tpu_custom_call.1} parent=1 // pred_region
      %s138 = ssub.s32 256, 256
      %139 = vsyncadd [#allocation4], %s138
      %s140 = sshll.u32 [#allocation5], 4
      %s141 = int_to_ptr.vmem [resolvable:$true] %s140
      %146 = dma.vmem_to_hbm [thread:$0]  %s141, 256, %s2, [#allocation4], 128, 128, 8
    $region17: #{tpu_custom_call.1} parent=1 // pred_fallthru
      _
    // Predicated region
    $region18: #{tpu_custom_call.1} parent=1 // pred_check
      _
    $region19: #{tpu_custom_call.1} parent=1 // pred_check_branch
      %148 = sbr.rel (0) target = $region21
    $region20: #{tpu_custom_call.1} parent=1 // pred_region
      %149 = dma.done [#allocation4], 256
    $region21: #{tpu_custom_call.1} parent=1 // pred_fallthru
      _
    %150 = vsyncpa [#allocation3], 1
    %151 = vsyncpa [#allocation4], 1

</llo_original>
